<compile_context>
chip_gen: v6e
topology: v6e:2x2x1
jax: 0.10.0
libtpu: 0.0.40
codegen_flags: <defaults>
</compile_context>

<pallas_src>
import functools

import jax
import jax.numpy as jnp
from jax.experimental import pallas as pl
from jax.experimental.pallas import tpu as pltpu

KERNEL_SIZE_D = 4
PADDING = 1
EPS = 1e-5          # nn.InstanceNorm2d default eps
NEG_SLOPE = 0.2     # LeakyReLU(0.2)
LANE = 128


def _round_up(x, m):
    return (x + m - 1) // m * m


def _vmem_budget_bytes():
    """Generation-aware VMEM budget (v7x has 64 MiB, v5e/v6e have 128 MiB)."""
    cap = 64 * 1024 * 1024
    try:
        info = pltpu.get_tpu_info()
        cap = int(getattr(info, "vmem_capacity_bytes", cap))
    except Exception:
        pass
    return min(int(0.6 * cap), 96 * 1024 * 1024)


def block_kernel(p_ref, w_ref, o_ref, acc_ref, *, n_pt, pt_sz, p_valid):
    # p_ref:   (1, K, pt_sz)           im2col patch columns (one batch, one P tile)
    # w_ref:   (C_out_p, K)            flattened conv weight (no K / 128-C padding)
    # o_ref:   (1, C_out_p, Ppad)      output block, resident across the P axis
    # acc_ref: (n_pt, C_out_p, pt_sz)  f32 raw conv output for the current batch
    pt = pl.program_id(1)

    # Conv tile as a single MXU matmul: channels on sublanes, spatial on lanes.
    acc_ref[pt] = jnp.dot(w_ref[...], p_ref[0],
                          preferred_element_type=jnp.float32)

    # Last P tile of this batch: the whole conv output is resident in VMEM ->
    # two-pass instance norm + LeakyReLU, lane-dense store of the output block.
    @pl.when(pt == n_pt - 1)
    def _():
        c_dim = acc_ref.shape[1]
        inv_p = 1.0 / p_valid

        def valid_mask(j, shape):
            lane = jax.lax.broadcasted_iota(jnp.int32, shape, 1)
            return lane + j * pt_sz < p_valid

        # Pass 1: per-channel mean.  Zero-padded P columns are exactly zero in
        # the conv output (zero patch columns), so no masking is needed here.
        s = jnp.zeros((c_dim, 1), jnp.float32)
        for j in range(n_pt):                      # static loop, n_pt is small
            s = s + jnp.sum(acc_ref[j], axis=1, keepdims=True)
        mean = s * inv_p

        # Pass 2: mean-subtracted variance (mask the ragged last tile only).
        ss = jnp.zeros((c_dim, 1), jnp.float32)
        for j in range(n_pt):
            d = acc_ref[j] - mean
            if (j + 1) * pt_sz > p_valid:          # static condition
                d = jnp.where(valid_mask(j, d.shape), d, 0.0)
            ss = ss + jnp.sum(d * d, axis=1, keepdims=True)
        inv_std = jax.lax.rsqrt(ss * inv_p + EPS)

        # Normalize + LeakyReLU(0.2); write the resident output block once.
        for j in range(n_pt):
            yn = (acc_ref[j] - mean) * inv_std
            o_ref[0, :, j * pt_sz:(j + 1) * pt_sz] = jnp.where(
                yn > 0, yn, NEG_SLOPE * yn).astype(o_ref.dtype)


def _im2col_nkp(x_nchw, kh, kw, stride, pad):
    """Reflect-pad and build im2col in (N, K, P) order with K ordered
    (c_in, kh, kw) to match PyTorch weight.reshape(C_out, -1)."""
    xp = jnp.pad(x_nchw, ((0, 0), (0, 0), (pad, pad), (pad, pad)),
                 mode="reflect")
    n, c, hp, wp = xp.shape
    ho = (hp - kh) // stride + 1
    wo = (wp - kw) // stride + 1
    cols = []
    for i in range(kh):
        for j in range(kw):
            cols.append(xp[:, :, i:i + (ho - 1) * stride + 1:stride,
                                 j:j + (wo - 1) * stride + 1:stride])
    pat = jnp.stack(cols, axis=2)                   # (N, C, kh*kw, Ho, Wo)
    pat = pat.reshape(n, c * kh * kw, ho * wo)      # (N, K, P)
    return pat, ho, wo


def block_forward(x, weight, bias, stride, *, p_tile=2048,
                  matmul_dtype=jnp.bfloat16):
    # x: (N, C_in, H, W); weight: (C_out, C_in, KH, KW); bias: (C_out,)
    # bias is accepted for API parity but unused: InstanceNorm2d(affine=False)
    # cancels a constant per-channel bias exactly.
    del bias
    N, C_in, H, W = x.shape
    C_out, _, KH, KW = weight.shape

    patches, Ho, Wo = _im2col_nkp(x, KH, KW, stride, PADDING)
    P = Ho * Wo
    K = C_in * KH * KW
    C_out_p = _round_up(C_out, 8)          # f32 sublane multiple only, not 128

    m_item = jnp.dtype(matmul_dtype).itemsize
    o_item = jnp.dtype(x.dtype).itemsize
    budget = _vmem_budget_bytes()

    # P tile: multiple of 128 lanes; shrink (best effort) to fit the budget.
    pt_sz = max(LANE, _round_up(min(p_tile, _round_up(P, LANE)), LANE))
    while pt_sz > LANE:
        ppad = _round_up(P, pt_sz)
        need = (2 * K * pt_sz * m_item             # patches (double-buffered)
                + 2 * C_out_p * K * m_item         # weight
                + 2 * C_out_p * ppad * o_item      # resident output block
                + C_out_p * ppad * 4)              # f32 conv scratch
        if need <= budget:
            break
        pt_sz = _round_up(pt_sz // 2, LANE)
    Ppad = _round_up(P, pt_sz)
    n_pt = Ppad // pt_sz

    patches = jnp.pad(patches, ((0, 0), (0, 0), (0, Ppad - P)))
    patches = patches.astype(matmul_dtype)
    w_mat = jnp.pad(weight.reshape(C_out, K),
                    ((0, C_out_p - C_out), (0, 0))).astype(matmul_dtype)

    out = pl.pallas_call(
        functools.partial(block_kernel, n_pt=n_pt, pt_sz=pt_sz, p_valid=P),
        out_shape=jax.ShapeDtypeStruct((N, C_out_p, Ppad), x.dtype),
        grid_spec=pltpu.PrefetchScalarGridSpec(
            num_scalar_prefetch=0,
            grid=(N, n_pt),
            in_specs=[
                pl.BlockSpec((1, K, pt_sz), lambda n, t: (n, 0, t)),
                pl.BlockSpec((C_out_p, K), lambda n, t: (0, 0)),
            ],
            out_specs=pl.BlockSpec((1, C_out_p, Ppad), lambda n, t: (n, 0, 0)),
            scratch_shapes=[pltpu.VMEM((n_pt, C_out_p, pt_sz), jnp.float32)]),
        compiler_params=pltpu.CompilerParams(
            dimension_semantics=("parallel", "arbitrary"),
            vmem_limit_bytes=budget),
    )(patches, w_mat)

    # Layout is already channels-first: drop padding and reshape to NCHW.
    return out[:, :C_out, :P].reshape(N, C_out, Ho, Wo)


def reference_forward(x, weight, bias, stride):
    # Pure-JAX f32 reference replicating PyTorch semantics.
    xp = jnp.pad(x, ((0, 0), (0, 0), (PADDING, PADDING), (PADDING, PADDING)),
                 mode="reflect")
    y = jax.lax.conv_general_dilated(
        xp, weight, window_strides=(stride, stride), padding="VALID",
        dimension_numbers=("NCHW", "OIHW", "NCHW"))
    y = y + bias.reshape(1, -1, 1, 1)
    mean = jnp.mean(y, axis=(2, 3), keepdims=True)
    var = jnp.mean((y - mean) ** 2, axis=(2, 3), keepdims=True)
    yn = (y - mean) / jnp.sqrt(var + EPS)
    return jnp.where(yn > 0, yn, NEG_SLOPE * yn)


if __name__ == "__main__":
    key = jax.random.PRNGKey(0)
    k_x, k_w, k_b = jax.random.split(key, 3)

    in_channels, out_channels = 4, 8
    N, H, W = 2, 16, 16

    x = jax.random.normal(k_x, (N, in_channels, H, W), dtype=jnp.float32)
    weight = 0.1 * jax.random.normal(
        k_w, (out_channels, in_channels, KERNEL_SIZE_D, KERNEL_SIZE_D),
        dtype=jnp.float32)
    bias = 0.1 * jax.random.normal(k_b, (out_channels,), dtype=jnp.float32)

    # stride=2: P=64 -> single 128-lane P tile (plus zero-padded columns).
    out = jax.block_until_ready(block_forward(x, weight, bias, stride=2))
    ref = jax.block_until_ready(reference_forward(x, weight, bias, stride=2))
    assert out.shape == ref.shape, (out.shape, ref.shape)
    err = jnp.max(jnp.abs(out - ref))
    assert jnp.allclose(out, ref, atol=3e-2, rtol=3e-2), \
        f"mismatch vs reference (stride=2): {err}"

    # stride=1 with p_tile=128: P=225 -> two P tiles -> exercises the
    # multi-tile VMEM-resident accumulation and ragged-tile masking.
    out1 = jax.block_until_ready(block_forward(x, weight, bias, stride=1,
                                               p_tile=128))
    ref1 = jax.block_until_ready(reference_forward(x, weight, bias, stride=1))
    assert out1.shape == ref1.shape, (out1.shape, ref1.shape)
    err1 = jnp.max(jnp.abs(out1 - ref1))
    assert jnp.allclose(out1, ref1, atol=3e-2, rtol=3e-2), \
        f"mismatch vs reference (stride=1): {err1}"

    print("KERNEL_OK")
</pallas_src>

<mosaic_0001>
module attributes {stable_mosaic.version = 11 : i64} {
  func.func @block_kernel(%arg0: i32, %arg1: i32, %arg2: memref<1x64x128xbf16, #tpu.memory_space<vmem>>, %arg3: memref<8x64xbf16, #tpu.memory_space<vmem>>, %arg4: memref<1x8x128xf32, #tpu.memory_space<vmem>>, %arg5: memref<1x8x128xf32, #tpu.memory_space<vmem>>) attributes {dimension_semantics = [#tpu.dimension_semantics<parallel>, #tpu.dimension_semantics<arbitrary>], iteration_bounds = array<i64: 2, 1>, scalar_prefetch = 0 : i64, scratch_operands = 1 : i64, tpu.core_type = #tpu.core_type<tc>, window_params = [{transform_indices = @transform_0, window_bounds = array<i64: 1, 64, 128>}, {pipeline_mode = #tpu.pipeline_mode<synchronous>, transform_indices = @transform_1, window_bounds = array<i64: 8, 64>}, {transform_indices = @transform_2, window_bounds = array<i64: 1, 8, 128>}]} {
    %c0 = arith.constant 0 : index
    %c0_0 = arith.constant 0 : index
    %0 = vector.load %arg3[%c0, %c0_0] : memref<8x64xbf16, #tpu.memory_space<vmem>>, vector<8x64xbf16>
    %c0_1 = arith.constant 0 : index
    %c0_2 = arith.constant 0 : index
    %c0_3 = arith.constant 0 : index
    %1 = vector.load %arg2[%c0_1, %c0_2, %c0_3] : memref<1x64x128xbf16, #tpu.memory_space<vmem>>, vector<1x64x128xbf16>
    %2 = vector.shape_cast %1 : vector<1x64x128xbf16> to vector<64x128xbf16>
    %cst = arith.constant dense<0.000000e+00> : vector<8x128xf32>
    %3 = tpu.matmul %0, %2, %cst {dimension_numbers = #tpu.dot_dimension_numbers<[1], [0], [0], [1], [0, 0, 1, 1], [], []>} : vector<8x64xbf16>, vector<64x128xbf16>, vector<8x128xf32> -> vector<8x128xf32>
    %4 = arith.index_cast %arg1 : i32 to index
    %c0_4 = arith.constant 0 : index
    %c0_5 = arith.constant 0 : index
    %5 = vector.load %arg5[%4, %c0_4, %c0_5] : memref<1x8x128xf32, #tpu.memory_space<vmem>>, vector<1x8x128xf32>
    %6 = vector.shape_cast %5 : vector<1x8x128xf32> to vector<8x128xf32>
    %7 = vector.shape_cast %3 : vector<8x128xf32> to vector<1x8x128xf32>
    tpu.vector_store %arg5[%4, %c0_4, %c0_5], %7 {strides = array<i32>} : memref<1x8x128xf32, #tpu.memory_space<vmem>>, vector<1x8x128xf32>,
    %c0_i32 = arith.constant 0 : i32
    %8 = arith.cmpi eq, %arg1, %c0_i32 : i32
    %9 = arith.extui %8 : i1 to i32
    %c0_i32_6 = arith.constant 0 : i32
    %10 = arith.cmpi ne, %9, %c0_i32_6 : i32
    scf.if %10 {
      %cst_7 = arith.constant 0.000000e+00 : f32
      %11 = vector.broadcast %cst_7 : f32 to vector<8x1xf32>
      %c0_8 = arith.constant 0 : index
      %c0_9 = arith.constant 0 : index
      %c0_10 = arith.constant 0 : index
      %12 = vector.load %arg5[%c0_8, %c0_9, %c0_10] : memref<1x8x128xf32, #tpu.memory_space<vmem>>, vector<1x8x128xf32>
      %13 = vector.shape_cast %12 : vector<1x8x128xf32> to vector<8x128xf32>
      %cst_11 = arith.constant dense<0.000000e+00> : vector<8xf32>
      %14 = vector.multi_reduction <add>, %13, %cst_11 [1] : vector<8x128xf32> to vector<8xf32>
      %15 = vector.shape_cast %14 : vector<8xf32> to vector<8x1xf32>
      %16 = arith.addf %11, %15 : vector<8x1xf32>
      %cst_12 = arith.constant 1.562500e-02 : f32
      %17 = vector.broadcast %cst_12 : f32 to vector<8x1xf32>
      %18 = arith.mulf %16, %17 : vector<8x1xf32>
      %cst_13 = arith.constant 0.000000e+00 : f32
      %19 = vector.broadcast %cst_13 : f32 to vector<8x1xf32>
      %c0_14 = arith.constant 0 : index
      %c0_15 = arith.constant 0 : index
      %c0_16 = arith.constant 0 : index
      %20 = vector.load %arg5[%c0_14, %c0_15, %c0_16] : memref<1x8x128xf32, #tpu.memory_space<vmem>>, vector<1x8x128xf32>
      %21 = vector.shape_cast %20 : vector<1x8x128xf32> to vector<8x128xf32>
      %22 = vector.broadcast %18 : vector<8x1xf32> to vector<8x128xf32>
      %23 = arith.subf %21, %22 : vector<8x128xf32>
      %24 = tpu.iota {dimensions = array<i32: 1>} : vector<8x128xi32>
      %c0_i32_17 = arith.constant 0 : i32
      %25 = vector.broadcast %c0_i32_17 : i32 to vector<8x128xi32>
      %26 = arith.addi %24, %25 : vector<8x128xi32>
      %c64_i32 = arith.constant 64 : i32
      %27 = vector.broadcast %c64_i32 : i32 to vector<8x128xi32>
      %28 = arith.cmpi slt, %26, %27 : vector<8x128xi32>
      %cst_18 = arith.constant 0.000000e+00 : f32
      %29 = vector.broadcast %cst_18 : f32 to vector<8x128xf32>
      %30 = arith.select %28, %23, %29 : vector<8x128xi1>, vector<8x128xf32>
      %31 = arith.mulf %30, %30 : vector<8x128xf32>
      %cst_19 = arith.constant dense<0.000000e+00> : vector<8xf32>
      %32 = vector.multi_reduction <add>, %31, %cst_19 [1] : vector<8x128xf32> to vector<8xf32>
      %33 = vector.shape_cast %32 : vector<8xf32> to vector<8x1xf32>
      %34 = arith.addf %19, %33 : vector<8x1xf32>
      %cst_20 = arith.constant 1.562500e-02 : f32
      %35 = vector.broadcast %cst_20 : f32 to vector<8x1xf32>
      %36 = arith.mulf %34, %35 : vector<8x1xf32>
      %cst_21 = arith.constant 9.99999974E-6 : f32
      %37 = vector.broadcast %cst_21 : f32 to vector<8x1xf32>
      %38 = arith.addf %36, %37 : vector<8x1xf32>
      %39 = math.rsqrt %38 : vector<8x1xf32>
      %c0_22 = arith.constant 0 : index
      %c0_23 = arith.constant 0 : index
      %c0_24 = arith.constant 0 : index
      %40 = vector.load %arg5[%c0_22, %c0_23, %c0_24] : memref<1x8x128xf32, #tpu.memory_space<vmem>>, vector<1x8x128xf32>
      %41 = vector.shape_cast %40 : vector<1x8x128xf32> to vector<8x128xf32>
      %42 = vector.broadcast %18 : vector<8x1xf32> to vector<8x128xf32>
      %43 = arith.subf %41, %42 : vector<8x128xf32>
      %44 = vector.broadcast %39 : vector<8x1xf32> to vector<8x128xf32>
      %45 = arith.mulf %43, %44 : vector<8x128xf32>
      %cst_25 = arith.constant 0.000000e+00 : f32
      %46 = vector.broadcast %cst_25 : f32 to vector<8x128xf32>
      %47 = arith.cmpf ogt, %45, %46 : vector<8x128xf32>
      %cst_26 = arith.constant 2.000000e-01 : f32
      %48 = vector.broadcast %cst_26 : f32 to vector<8x128xf32>
      %49 = arith.mulf %48, %45 : vector<8x128xf32>
      %50 = arith.select %47, %45, %49 : vector<8x128xi1>, vector<8x128xf32>
      %c0_27 = arith.constant 0 : index
      %c0_28 = arith.constant 0 : index
      %c0_29 = arith.constant 0 : index
      %51 = vector.load %arg4[%c0_27, %c0_28, %c0_29] : memref<1x8x128xf32, #tpu.memory_space<vmem>>, vector<1x8x128xf32>
      %52 = vector.shape_cast %51 : vector<1x8x128xf32> to vector<8x128xf32>
      %53 = vector.shape_cast %50 : vector<8x128xf32> to vector<1x8x128xf32>
      tpu.vector_store %arg4[%c0_27, %c0_28, %c0_29], %53 {strides = array<i32>} : memref<1x8x128xf32, #tpu.memory_space<vmem>>, vector<1x8x128xf32>,
    } else {
    }
    return
  }
  func.func @transform_0(%arg0: i32, %arg1: i32) -> (i32, i32, i32) {
    %c0_i32 = arith.constant 0 : i32
    %c0_i32_0 = arith.constant 0 : i32
    return %arg0, %c0_i32, %arg1 : i32, i32, i32
  }
  func.func @transform_1(%arg0: i32, %arg1: i32) -> (i32, i32) {
    %c0_i32 = arith.constant 0 : i32
    %c0_i32_0 = arith.constant 0 : i32
    %c0_i32_1 = arith.constant 0 : i32
    return %c0_i32, %c0_i32_0 : i32, i32
  }
  func.func @transform_2(%arg0: i32, %arg1: i32) -> (i32, i32, i32) {
    %c0_i32 = arith.constant 0 : i32
    %c0_i32_0 = arith.constant 0 : i32
    %c0_i32_1 = arith.constant 0 : i32
    return %arg0, %c0_i32, %c0_i32_0 : i32, i32, i32
  }
}

</mosaic_0001>

<llo_original>
// kernel: tpu_custom_call.1
$region0: #{tpu_custom_call.1}
  #allocation0 [shape = 'u32[]', space=smem, size = 0x4, offset = 0x4, fixed_abs, tag = 'smem constant byte address 0x4 - core index']
  #allocation1 [shape = 'u32[144,128]{1,0:T(1,128)}', space=vmem, size = 0x12000, scoped, tag = 'internal scratch']
  #allocation2 [shape = 'f32[1,8,128]{2,1,0:T(8,128)}', space=vmem, size = 0x1000, scoped, tag = 'scratch operand']
  %s0 = inlined_call_operand.hbm [shape: bf16[2,64,128], index: 0, kind: input, shape index: {}]
  %s1 = inlined_call_operand.hbm [shape: bf16[8,64], index: 1, kind: input, shape index: {}]
  %s2 = inlined_call_operand.hbm [shape: f32[2,8,128], index: 2, kind: output, shape index: {}]
  %s3 = sld [smem:[#allocation0]]
  $region53: #{tpu_custom_call.1} parent=0
    _
  %s5 = ssub.s32 1, %s3
  %s6 = scalar_select 0, %s5, %s3
  $region1: #{tpu_custom_call.1} parent=0
    #allocation3 [shape = 'u8[32768]{0}', space=vmem, size = 0x8000, scoped, tag = 'input window, operand 0']
    #allocation4 [shape = 's32[2]{0}', space=sflag, size = 0x8, scoped, tag = 'scoped memory for tpu_custom_call.1']
    #allocation5 [shape = 's32[2]{0}', space=sflag, size = 0x8, scoped, tag = 'scoped memory for tpu_custom_call.1']
    #allocation6 [shape = 'u8[2048]{0}', space=vmem, size = 0x800, scoped, tag = 'input window, operand 1, single buffered']
    #allocation7 [shape = 's32[1]{0}', space=sflag, size = 0x4, scoped, tag = 'scoped memory for tpu_custom_call.1']
    #allocation8 [shape = 'u8[8192]{0}', space=vmem, size = 0x2000, scoped, tag = 'output window, operand 0']
    %7 = vsyncpa [#allocation4], 0
    %s8 = scalar_lea.sflag [#allocation4], 1
    %9 = vsyncpa %s8, 0
    %10 = vsyncpa [#allocation7], 0
    %11 = vsyncpa [#allocation5], 0
    %s12 = scalar_lea.sflag [#allocation5], 1
    %13 = vsyncpa %s12, 0
    loop: start=0, step=1, limit=4
    $region2: #{tpu_custom_call.1} parent=1 // loop_pre_header
      _
    $region3: #{tpu_custom_call.1} parent=1 // loop_header
      %s15 = sphi 0, %s19
      %p16 = scmp.ge.s32.totalorder %s15, 4
      %s22 = sphi 0, %s34
      %s23 = sphi 0, %s30
      %s24 = sphi 0, %s22
      %s25 = sphi 0, %s23
      %s26 = sphi 0, %s24
      %s27 = sphi 0, %s25
      %s39 = sphi 0, %s41
      %s42 = sphi 0, %s39
      %s43 = sphi 0, %s42
      %s59 = sphi 0, %s43
      %s63 = sphi 0, %s63
      %s65 = sphi 0, %s63
      %s66 = sphi 0, %s65
      %s80 = sphi 0, %s66
      %s86 = sphi 0, %s88
      %s89 = sphi 0, %s86
      %s90 = sphi 0, %s89
      %s106 = sphi 0, %s90
    $region4: #{tpu_custom_call.1} parent=1 // loop_header_branch
      %18 = sbr.rel (%p16) target = $region8
    $region5: #{tpu_custom_call.1} parent=1 // loop_body
      %s20 = ssub.s32 %s15, 1
      %s21 = ssub.s32 %s15, 2
      %s28 = sadd.s32 1, %s23
      %p29 = scmp.ge.s32.totalorder %s28, 1
      %s30 = scalar_select %p29, 0, %s28
      %s31 = sadd.s32 1, %s22
      %s32 = scalar_select %p29, %s31, %s22
      %p33 = scmp.ge.s32.totalorder %s32, 2
      %s34 = scalar_select %p33, 0, %s32
      %s35 = ssub.s32 %s22, %s34
      %s36 = ssub.s32 %s23, %s30
      %s37 = sor.u32 %s35, %s36
      %p38 = scmp.eq.s32.totalorder %s37, 0
      %s40 = sadd.s32 %s39, 1
      %s41 = scalar_select %p38, %s39, %s40
      %p44 = pneg %p38
      %p45 = scmp.eq.s32.totalorder %s15, 1
      %p46 = por %p44, %p45
      %p47 = scmp.ne.s32.totalorder %s39, %s42
      %p48 = scmp.eq.s32.totalorder %s15, 0
      %p49 = por %p47, %p48
      %p50 = scmp.ne.s32.totalorder %s39, %s42
      %p51 = scmp.eq.s32.totalorder %s20, 1
      %p52 = por %p50, %p51
      %p53 = scmp.ne.s32.totalorder %s42, %s43
      %p54 = scmp.eq.s32.totalorder %s20, 0
      %p55 = por %p53, %p54
      %p56 = scmp.ne.s32.totalorder %s42, %s43
      %p57 = scmp.eq.s32.totalorder %s21, 1
      %p58 = por %p56, %p57
      %p60 = scmp.ne.s32.totalorder %s43, %s59
      %p61 = scmp.eq.s32.totalorder %s21, 0
      %p62 = por %p60, %p61
      %s64 = sadd.s32 %s63, 1
      %p67 = scmp.eq.s32.totalorder %s15, 1
      %p68 = scmp.ne.s32.totalorder %s63, %s65
      %p69 = scmp.eq.s32.totalorder %s15, 0
      %p70 = por %p68, %p69
      %p71 = scmp.ne.s32.totalorder %s63, %s65
      %p72 = scmp.eq.s32.totalorder %s20, 1
      %p73 = por %p71, %p72
      %p74 = scmp.ne.s32.totalorder %s65, %s66
      %p75 = scmp.eq.s32.totalorder %s20, 0
      %p76 = por %p74, %p75
      %p77 = scmp.ne.s32.totalorder %s65, %s66
      %p78 = scmp.eq.s32.totalorder %s21, 1
      %p79 = por %p77, %p78
      %p81 = scmp.ne.s32.totalorder %s66, %s80
      %p82 = scmp.eq.s32.totalorder %s21, 0
      %p83 = por %p81, %p82
      %s84 = ssub.s32 %s22, %s34
      %p85 = scmp.eq.s32.totalorder %s84, 0
      %s87 = sadd.s32 %s86, 1
      %s88 = scalar_select %p85, %s86, %s87
      %p91 = pneg %p85
      %p92 = scmp.eq.s32.totalorder %s15, 1
      %p93 = por %p91, %p92
      %p94 = scmp.ne.s32.totalorder %s86, %s89
      %p95 = scmp.eq.s32.totalorder %s15, 0
      %p96 = por %p94, %p95
      %p97 = scmp.ne.s32.totalorder %s86, %s89
      %p98 = scmp.eq.s32.totalorder %s20, 1
      %p99 = por %p97, %p98
      %p100 = scmp.ne.s32.totalorder %s89, %s90
      %p101 = scmp.eq.s32.totalorder %s20, 0
      %p102 = por %p100, %p101
      %p103 = scmp.ne.s32.totalorder %s89, %s90
      %p104 = scmp.eq.s32.totalorder %s21, 1
      %p105 = por %p103, %p104
      %p107 = scmp.ne.s32.totalorder %s90, %s106
      %p108 = scmp.eq.s32.totalorder %s21, 0
      %p109 = por %p107, %p108
      %p110 = scmp.le.s32.totalorder 1, %s15
      %p111 = scmp.lt.s32.totalorder %s15, 3
      %p112 = pnand %p110, %p111
      %p113 = pneg %p112
      // Predicated region
      $region9: #{tpu_custom_call.1} parent=5 // pred_check
        _
      $region10: #{tpu_custom_call.1} parent=5 // pred_check_branch
        %115 = sbr.rel (%p112) target = $region12
      $region11: #{tpu_custom_call.1} parent=5 // pred_region
        %s116 = ssub.s32 %s15, 1
        // Predicated region
        $region13: #{tpu_custom_call.1} parent=11 // pred_check
          %p117 = pneg %p76
        $region14: #{tpu_custom_call.1} parent=11 // pred_check_branch
          %119 = sbr.rel (%p117) target = $region16
        $region15: #{tpu_custom_call.1} parent=11 // pred_region
          %s121 = ssub.s32 64, 64
          %122 = vsyncadd [#allocation7], %s121
          %s124 = sshll.u32 [#allocation6], 4
          %s125 = int_to_ptr.vmem [resolvable:$true] %s124
          %127 = dma.hbm_to_vmem [thread:$0]  %s1, 64, %s125, [#allocation7]
        $region16: #{tpu_custom_call.1} parent=11 // pred_fallthru
          _
      $region12: #{tpu_custom_call.1} parent=5 // pred_fallthru
        _
      %p128 = scmp.lt.s32.totalorder %s15, 2
      // Predicated region
      $region17: #{tpu_custom_call.1} parent=5 // pred_check
        %p129 = pneg %p128
      $region18: #{tpu_custom_call.1} parent=5 // pred_check_branch
        %131 = sbr.rel (%p129) target = $region20
      $region19: #{tpu_custom_call.1} parent=5 // pred_region
        // Predicated region
        $region21: #{tpu_custom_call.1} parent=19 // pred_check
          %p132 = pneg %p49
        $region22: #{tpu_custom_call.1} parent=19 // pred_check_branch
          %134 = sbr.rel (%p132) target = $region24
        $region23: #{tpu_custom_call.1} parent=19 // pred_region
          %s135 = sand.u32 %s39, 1
          %s136 = scalar_lea.sflag [#allocation4], %s135
          %s137 = sand.u32 %s39, 1
          %s138 = smul.addr %s137, 32
          %s139 = scalar_lea.vmem [#allocation3], %s138
          %s141 = ssub.s32 512, 512
          %142 = vsyncadd %s136, %s141
          %s143 = smul.addr %s22, 8
          %s144 = sadd.s32 %s23, %s143
          %s145 = smul.addr %s144, 64
          %s146 = scalar_lea.hbm %s0, %s145
          %s147 = sshll.u32 %s139, 4
          %s148 = int_to_ptr.vmem [resolvable:$true] %s147
          %153 = dma.hbm_to_vmem [thread:$0]  %s146, 512, %s148, %s136, 64, 64, 4
        $region24: #{tpu_custom_call.1} parent=19 // pred_fallthru
          _
      $region20: #{tpu_custom_call.1} parent=5 // pred_fallthru
        _
      %p154 = scmp.le.s32.totalorder 1, %s15
      %p155 = scmp.lt.s32.totalorder %s15, 3
      %p156 = pnand %p154, %p155
      %p157 = pneg %p156
      // Predicated region
      $region25: #{tpu_custom_call.1} parent=5 // pred_check
        _
      $region26: #{tpu_custom_call.1} parent=5 // pred_check_branch
        %159 = sbr.rel (%p156) target = $region28
      $region27: #{tpu_custom_call.1} parent=5 // pred_region
        %s160 = ssub.s32 %s15, 1
        %s161 = sand.u32 %s42, 1
        %s162 = scalar_lea.sflag [#allocation4], %s161
        %s163 = sand.u32 %s42, 1
        %s164 = smul.addr %s163, 32
        %s165 = scalar_lea.vmem [#allocation3], %s164
        // Predicated region
        $region29: #{tpu_custom_call.1} parent=27 // pred_check
          %p166 = pneg %p55
        $region30: #{tpu_custom_call.1} parent=27 // pred_check_branch
          %168 = sbr.rel (%p166) target = $region32
        $region31: #{tpu_custom_call.1} parent=27 // pred_region
          %169 = dma.done %s162, 512
        $region32: #{tpu_custom_call.1} parent=27 // pred_fallthru
          _
        // Predicated region
        $region33: #{tpu_custom_call.1} parent=27 // pred_check
          %p170 = pneg %p76
        $region34: #{tpu_custom_call.1} parent=27 // pred_check_branch
          %172 = sbr.rel (%p170) target = $region36
        $region35: #{tpu_custom_call.1} parent=27 // pred_region
          %173 = dma.done [#allocation7], 64
        $region36: #{tpu_custom_call.1} parent=27 // pred_fallthru
          _
        %s174 = sand.u32 %s42, 1
        %s175 = scalar_lea.sflag [#allocation4], %s174
        %s176 = sand.u32 %s42, 1
        %s177 = smul.addr %s176, 32
        %s178 = scalar_lea.vmem [#allocation3], %s177
        %p179 = pneg %p55
        %p180 = pneg %p52
        %p181 = pneg %p76
        %p182 = pneg %p73
        %p183 = pneg %p102
        %p184 = pneg %p99
        %s185 = sand.u32 %s89, 1
        %s186 = scalar_lea.sflag [#allocation5], %s185
        %s187 = sand.u32 %s89, 1
        %s188 = smul.addr %s187, 8
        %s189 = scalar_lea.vmem [#allocation8], %s188
        %v191 = vld [vmem:[#allocation6] sm:$0xf]
        %v192 = vld [vmem:[%s165] sm:$0xf]
        %v193 = vld [vmem:[%s165 + $0x4] sm:$0xf]
        %v194 = vld [vmem:[%s165 + $0x8] sm:$0xf]
        %v195 = vld [vmem:[%s165 + $0xc] sm:$0xf]
        %v196 = vld [vmem:[%s165 + $0x10] sm:$0xf]
        %v197 = vld [vmem:[%s165 + $0x14] sm:$0xf]
        %v198 = vld [vmem:[%s165 + $0x18] sm:$0xf]
        %v199 = vld [vmem:[%s165 + $0x1c] sm:$0xf]
        %v208 = vunpack.c.l.b16 %v192
        %v209 = vunpack.c.l.b16 %v193
        %v210 = vunpack.c.l.b16 %v194
        %v211 = vunpack.c.l.b16 %v195
        %v212 = vunpack.c.l.b16 %v196
        %v213 = vunpack.c.l.b16 %v197
        %v214 = vunpack.c.l.b16 %v198
        %v215 = vunpack.c.l.b16 %v199
        %v216 = vpack.c.b16 %v209, %v208
        %v217 = vpack.c.b16 %v211, %v210
        %v218 = vpack.c.b16 %v213, %v212
        %v219 = vpack.c.b16 %v215, %v214
        %vm224 = vcmask 523264
        %v226 = vsel %vm224, %v191, 0
        %228 = vmatprep.subr.bf16.mxu0 0
        %229 = vmatpush1.bf16.msra.mxu0 0
        %230 = vmatprep.subr.bf16.mxu0 0
        %231 = vmatpush1.bf16.msra.mxu0 0
        %232 = vmatprep.subr.bf16.mxu0 0
        %233 = vmatpush1.bf16.msra.mxu0 0
        %234 = vmatprep.subr.bf16.mxu0 0
        %235 = vmatpush1.bf16.msra.mxu0 0
        %236 = vmatprep.subr.bf16.mxu0 0
        %237 = vmatpush1.bf16.msra.mxu0 %v219
        %238 = vmatprep.subr.bf16.mxu0 0
        %239 = vmatpush1.bf16.msra.mxu0 %v218
        %240 = vmatprep.subr.bf16.mxu0 0
        %241 = vmatpush1.bf16.msra.mxu0 %v217
        %242 = vmatprep.subr.bf16.mxu0 0
        %243 = vmatpush1.bf16.msra.mxu0 %v216
        %244 = vmatprep.subr.bf16.mxu0 0
        %245 = vmatpush2.bf16.msra.mxu0 0
        %246 = vmatprep.subr.bf16.mxu0 0
        %247 = vmatpush2.bf16.msra.mxu0 0
        %248 = vmatprep.subr.bf16.mxu0 0
        %249 = vmatpush2.bf16.msra.mxu0 0
        %250 = vmatprep.subr.bf16.mxu0 0
        %251 = vmatpush2.bf16.msra.mxu0 0
        %252 = vmatprep.subr.bf16.mxu0 0
        %253 = vmatpush2.bf16.msra.mxu0 0
        %254 = vmatprep.subr.bf16.mxu0 0
        %255 = vmatpush2.bf16.msra.mxu0 0
        %256 = vmatprep.subr.bf16.mxu0 0
        %257 = vmatpush2.bf16.msra.mxu0 0
        %258 = vmatprep.subr.bf16.mxu0 0
        %259 = vmatpush2.bf16.msra.mxu0 0
        %260 = vmatprep.mubr.bf16.mxu0 0
        %261 = vmatmul.mubr.bf16.gmra.mxu0 %v226
        %v262 = vpop.f32.mrf.mxu0
        %v263 = vadd.f32 0.0, %v262
        %v264 = vpop.f32.mrf.mxu0
        %v265 = vpop.f32.mrf.mxu0
        %v266 = vpop.f32.mrf.mxu0
        %267 = vdwg.mxu0
        %s268 = smul.u32 %s25, 8
        %s269 = scalar_lea.vmem [#allocation2], %s268
        %270 = vst [vmem:[%s269] sm:$0xff] %v263
        %p271 = scmp.eq.s32.totalorder %s25, 0
        // Predicated region
        $region37: #{tpu_custom_call.1} parent=27 // pred_check
          %p272 = pneg %p271
        $region38: #{tpu_custom_call.1} parent=27 // pred_check_branch
          %274 = sbr.rel (%p272) target = $region40
        $region39: #{tpu_custom_call.1} parent=27 // pred_region
          %v275 = vld [vmem:[#allocation2] sm:$0xff]
          %276 = vadd.xlane.f32.xlu0 %v275
          %v277 = vpop.xlane.xlu0 %276
          %v278 = vadd.f32 %v277, 0.0
          %v279 = vmul.f32 %v278, 0.015625
          %v280 = vsub.f32 %v275, %v279
          %v281 = vlaneseq
          %v282 = vand.u32 %v281, 127
          %vm283 = vcmp.lt.s32.totalorder %v282, 64
          %v284 = vsel %vm283, %v280, 0.0
          %v285 = vmul.f32 %v284, %v284
          %286 = vadd.xlane.f32.xlu0 %v285
          %v287 = vpop.xlane.xlu0 %286
          %v288 = vadd.f32 %v287, 0.0
          %v289 = vmul.f32 %v288, 0.015625
          %v290 = vadd.f32 %v289, 1e-05
          %v291 = vrsqrt.pop %v290
          %v292 = vmul.f32 %v280, %v291
          %vm293 = vcmp.gt.f32.partialorder %v292, 0.0
          %v294 = vmul.f32 %v292, 0.2
          %v295 = vsel %vm293, %v292, %v294
          %296 = vst [vmem:[%s189] sm:$0xff] %v295
        $region40: #{tpu_custom_call.1} parent=27 // pred_fallthru
          _
        %s297 = sand.u32 %s89, 1
        %s298 = scalar_lea.sflag [#allocation5], %s297
        %s299 = sand.u32 %s89, 1
        %s300 = smul.addr %s299, 8
        %s301 = scalar_lea.vmem [#allocation8], %s300
        // Predicated region
        $region41: #{tpu_custom_call.1} parent=27 // pred_check
          %p302 = pneg %p99
        $region42: #{tpu_custom_call.1} parent=27 // pred_check_branch
          %304 = sbr.rel (%p302) target = $region44
        $region43: #{tpu_custom_call.1} parent=27 // pred_region
          %s306 = ssub.s32 128, 128
          %307 = vsyncadd %s298, %s306
          %s308 = smul.addr %s24, 128
          %s309 = scalar_lea.hbm %s2, %s308
          %s311 = sshll.u32 %s301, 4
          %s312 = int_to_ptr.vmem [resolvable:$true] %s311
          %314 = dma.vmem_to_hbm [thread:$0]  %s312, 128, %s309, %s298
        $region44: #{tpu_custom_call.1} parent=27 // pred_fallthru
          _
      $region28: #{tpu_custom_call.1} parent=5 // pred_fallthru
        _
      %p315 = scmp.le.s32.totalorder 2, %s15
      // Predicated region
      $region45: #{tpu_custom_call.1} parent=5 // pred_check
        %p316 = pneg %p315
      $region46: #{tpu_custom_call.1} parent=5 // pred_check_branch
        %318 = sbr.rel (%p316) target = $region48
      $region47: #{tpu_custom_call.1} parent=5 // pred_region
        %s319 = ssub.s32 %s15, 2
        // Predicated region
        $region49: #{tpu_custom_call.1} parent=47 // pred_check
          %p320 = pneg %p105
        $region50: #{tpu_custom_call.1} parent=47 // pred_check_branch
          %322 = sbr.rel (%p320) target = $region52
        $region51: #{tpu_custom_call.1} parent=47 // pred_region
          %s323 = sand.u32 %s90, 1
          %s324 = scalar_lea.sflag [#allocation5], %s323
          %s325 = sand.u32 %s90, 1
          %s326 = smul.addr %s325, 8
          %s327 = scalar_lea.vmem [#allocation8], %s326
          %328 = dma.done %s324, 128
        $region52: #{tpu_custom_call.1} parent=47 // pred_fallthru
          _
      $region48: #{tpu_custom_call.1} parent=5 // pred_fallthru
        _
    $region6: #{tpu_custom_call.1} parent=1 // loop_footer
      %s19 = sadd.s32 1, %s15
    $region7: #{tpu_custom_call.1} parent=1 // loop_footer_branch
      %14 = sbr.rel target = $region3
    $region8: #{tpu_custom_call.1} parent=1 // loop_exit
      _
    %329 = vsyncpa [#allocation4], 1
    %s330 = scalar_lea.sflag [#allocation4], 1
    %331 = vsyncpa %s330, 1
    %332 = vsyncpa [#allocation7], 1
    %333 = vsyncpa [#allocation5], 1
    %s334 = scalar_lea.sflag [#allocation5], 1
    %335 = vsyncpa %s334, 1

</llo_original>
